<compile_context>
chip_gen: v5e
topology: v5e:2x2
jax: 0.10.0
libtpu: 0.0.40
codegen_flags: <defaults>
</compile_context>

<pallas_src>
import jax
import jax.numpy as jnp
from jax.experimental import pallas as pl
from jax.experimental.pallas import tpu as pltpu

MASK_VALUE = -1e30
_LANE = 128
_SUBLANE = 8


def _attn_agg_kernel(x_ref, mask_ref, w1t_ref, b1_ref, w2c_ref, out_ref):
    # x_ref:    (K, TL, D)  block of ENCoutput (original [B,K,L,D], batch squeezed)
    # mask_ref: (K, TL, 1)  0/1 mask block
    # w1t_ref:  (D, H)      Linear(d_model -> hin_d) weight, transposed
    # b1_ref:   (1, H)      Linear bias
    # w2c_ref:  (H, 1)      W: Linear(hin_d -> 1, bias=False) weight, as a column
    # out_ref:  (TL, D)
    K, TL, D = x_ref.shape

    x = x_ref[...].astype(jnp.float32)              # (K, TL, D)
    mask = mask_ref[...].astype(jnp.float32)        # (K, TL, 1)

    # ---- scores: one fused (K*TL, D) x (D, H) MXU matmul, then an MXU matvec ----
    x2d = x.reshape(K * TL, D)                      # leading-dim collapse only
    h = jnp.tanh(
        jnp.dot(x2d, w1t_ref[...], preferred_element_type=jnp.float32)
        + b1_ref[...])                              # (K*TL, H), one hoisted bias bcast
    scores = jnp.dot(h, w2c_ref[...], preferred_element_type=jnp.float32)  # (K*TL, 1)
    scores = scores.reshape(K, TL, 1)               # leading-dim split only

    # ---- mask (exact PyTorch formula) + numerically stable softmax over K ----
    masked = mask * scores + (1.0 - mask) * MASK_VALUE          # (K, TL, 1)
    smax = jnp.max(masked, axis=0, keepdims=True)               # (1, TL, 1)
    exps = jnp.exp(masked - smax)                               # (K, TL, 1)
    denom = jnp.sum(exps, axis=0, keepdims=True)                # (1, TL, 1)
    p = exps / denom        # exact divide: only TL denominators, accuracy is free

    # ---- weighted aggregation over K, then ts_mask = clamp(sum_K mask, max=1) ----
    agg = jnp.sum(p * x, axis=0)                                # (TL, D)
    ts = jnp.minimum(jnp.sum(mask, axis=0), 1.0)                # (TL, 1)

    # NOTE: for deployments with D < 128 a lane-dense output repack
    # ((TL, D) -> (TL/r, r*D), r = 128//D) would raise store lane utilization;
    # skipped here because the input traffic (K x larger, same lane density)
    # dominates the memory roofline and the sublane->lane relayout adds
    # lowering risk at these shapes.
    out_ref[...] = (agg * ts).astype(out_ref.dtype)


def _ceil_to(n, m):
    return -(-n // m) * m


def _padded_step_bytes(tl, K, D, H, in_bytes, out_bytes):
    """Per-grid-step VMEM estimate including (8,128) tile padding and the
    f32 intermediates Mosaic must materialize in the kernel body."""
    tlp = _ceil_to(tl, _SUBLANE)
    Dp = _ceil_to(D, _LANE)
    Hp = _ceil_to(H, _LANE)
    ktp = _ceil_to(K * tl, _SUBLANE)

    # Double-buffered pipeline blocks (x, mask, out); mask's trailing 1 -> 128 lanes.
    x_blk = K * tlp * Dp * in_bytes
    m_blk = K * tlp * _LANE * in_bytes
    o_blk = tlp * Dp * out_bytes
    pipelined = 2 * (x_blk + m_blk + o_blk)

    # Parameter tensors (tiny, but double-buffered by the pipeline too), f32.
    weights = 2 * 4 * (_ceil_to(D, _SUBLANE) * Hp        # w1t
                       + _SUBLANE * Hp                    # b1
                       + _ceil_to(H, _SUBLANE) * _LANE)   # w2 column

    # f32 intermediates inside the kernel body.
    interm = 4 * (
        K * tlp * Dp            # x upcast to f32
        + ktp * Hp              # h = tanh(x @ w1t + b1)
        + ktp * _LANE           # scores (K*TL, 1), lane-padded
        + 5 * K * tlp * _LANE   # mask f32 / masked / exps / p / reshaped scores
        + K * tlp * Dp          # p * x product
        + 2 * tlp * Dp          # agg and the final scaled result
        + 3 * tlp * _LANE       # smax / denom / ts
    )
    return pipelined + weights + interm


def _vmem_limit_bytes():
    """Generation-aware VMEM request: ~96 MiB on 128 MiB parts (v5e/v6e),
    ~48 MiB on 64 MiB parts (v7x); conservative fallback if the query fails."""
    cap = 64 << 20  # assume v7x (smallest VMEM) if we cannot query
    try:
        cap = int(getattr(pltpu.get_tpu_info(), "vmem_capacity_bytes", cap))
    except Exception:
        pass
    return max(32 << 20, min(cap - (16 << 20), 96 << 20))


def _choose_row_tile(B, K, L, D, H, budget, in_bytes, out_bytes):
    """Largest row tile (multiple of 8, or the full L) whose padded footprint
    fits the budget; with B == 1 prefer >= 2 (even) tiles for v7x megacore."""

    def fits(t):
        return _padded_step_bytes(t, K, D, H, in_bytes, out_bytes) <= budget

    def ntiles(t):
        return -(-L // t)

    feasible = [t for t in range(_SUBLANE, min(L, 8192) + 1, _SUBLANE) if fits(t)]

    if fits(L) and L <= 8192:
        best = L                               # full-extent block, always layout-legal
    elif feasible:
        best = max(feasible)
    else:
        # Nothing fits the conservative budget: fall back to the smallest legal
        # tile and rely on the explicit vmem_limit_bytes headroom.
        # TODO(synk): tile over K as well if K*D is so large that even an
        # 8-row block overflows VMEM.
        best = L if L < _SUBLANE else _SUBLANE

    # v7x has 2 TensorCores; with a single batch make sure both get row tiles.
    if B == 1 and L > _SUBLANE:
        if ntiles(best) < 2 or ntiles(best) % 2 == 1:
            even = [t for t in feasible if ntiles(t) >= 2 and ntiles(t) % 2 == 0]
            two = [t for t in feasible if ntiles(t) >= 2]
            if even:
                best = max(even)
            elif two:
                best = max(two)
    return best


def attention_aggregator(enc, mask, w1, b1, w2, *, tl=None, vmem_limit_bytes=None):
    """enc: [B, K, L, D], mask: [B, K, L, 1] -> [B, L, D] (enc.dtype).

    Accepts f32 or bf16 enc/mask; bf16 halves HBM traffic and compute is done
    in f32 inside the kernel."""
    B, K, L, D = enc.shape
    H = w1.shape[0]
    assert mask.shape == (B, K, L, 1)

    if vmem_limit_bytes is None:
        vmem_limit_bytes = _vmem_limit_bytes()
    in_bytes = jnp.dtype(enc.dtype).itemsize
    out_bytes = in_bytes
    if tl is None:
        tl = _choose_row_tile(B, K, L, D, H, int(vmem_limit_bytes * 0.85),
                              in_bytes, out_bytes)
    assert tl == L or tl % _SUBLANE == 0

    n_row_tiles = -(-L // tl)      # tail block allowed; rows are independent

    # Only the tiny parameter tensors are re-laid-out host-side; enc/mask stay
    # in their original [B, K, L, *] layout (no extra HBM relayout pass).
    w1t = jnp.transpose(w1).astype(jnp.float32)           # [D, H]
    b1r = b1.reshape(1, H).astype(jnp.float32)            # [1, H]
    w2c = w2.reshape(H, 1).astype(jnp.float32)            # [H, 1] column for matvec

    out = pl.pallas_call(
        _attn_agg_kernel,
        out_shape=jax.ShapeDtypeStruct((B, L, D), enc.dtype),
        grid_spec=pltpu.PrefetchScalarGridSpec(
            num_scalar_prefetch=0,
            grid=(B, n_row_tiles),
            in_specs=[
                pl.BlockSpec((None, K, tl, D), lambda b, i: (b, 0, i, 0)),
                pl.BlockSpec((None, K, tl, 1), lambda b, i: (b, 0, i, 0)),
                pl.BlockSpec((D, H), lambda b, i: (0, 0)),
                pl.BlockSpec((1, H), lambda b, i: (0, 0)),
                pl.BlockSpec((H, 1), lambda b, i: (0, 0)),
            ],
            out_specs=pl.BlockSpec((None, tl, D), lambda b, i: (b, i, 0)),
        ),
        compiler_params=pltpu.CompilerParams(
            dimension_semantics=("parallel", "parallel"),
            vmem_limit_bytes=int(vmem_limit_bytes)),
    )(enc, mask, w1t, b1r, w2c)

    return out


def attention_aggregator_ref(enc, mask, w1, b1, w2):
    """Pure-JAX reference mirroring the PyTorch forward exactly."""
    m = jnp.transpose(mask, (0, 2, 1, 3)).astype(jnp.float32)   # [B, L, K, 1]
    ts = jnp.sum(m, axis=2)                                     # [B, L, 1]
    ts = jnp.where(ts > 1.0, 1.0, ts)
    x = jnp.transpose(enc, (0, 2, 1, 3)).astype(jnp.float32)    # [B, L, K, D]
    attn = jnp.tanh(x @ w1.T + b1) @ w2.T                       # [B, L, K, 1]
    attn = m * attn + (1.0 - m) * MASK_VALUE
    attn = jax.nn.softmax(attn, axis=-2)
    out = jnp.matmul(jnp.swapaxes(x, -1, -2), attn)[..., 0]     # [B, L, D]
    return (out * ts).astype(enc.dtype)


if __name__ == "__main__":
    B, K, L, D = 2, 4, 8, 32      # out_dim = D = 32, hidden H = 2*D = 64
    H = 2 * D

    key = jax.random.PRNGKey(0)
    k_enc, k_mask, k_w1, k_b1, k_w2 = jax.random.split(key, 5)

    enc = jax.random.normal(k_enc, (B, K, L, D), dtype=jnp.float32)
    mask = (jax.random.uniform(k_mask, (B, K, L, 1)) > 0.3).astype(jnp.float32)

    # Deterministic synthetic parameters (PyTorch Linear weight shapes).
    w1 = 0.1 * jax.random.normal(k_w1, (H, D), dtype=jnp.float32)   # Linear(D, H)
    b1 = 0.1 * jax.random.normal(k_b1, (H,), dtype=jnp.float32)
    w2 = 0.1 * jax.random.normal(k_w2, (1, H), dtype=jnp.float32)   # Linear(H, 1)

    out = attention_aggregator(enc, mask, w1, b1, w2)
    out = jax.block_until_ready(out)

    ref = attention_aggregator_ref(enc, mask, w1, b1, w2)
    assert out.shape == (B, L, D)
    assert jnp.allclose(out, ref, atol=1e-4, rtol=1e-4), "mismatch vs reference"

    print("KERNEL_OK")
</pallas_src>

<mosaic_0001>
module attributes {stable_mosaic.version = 11 : i64} {
  func.func @_attn_agg_kernel(%arg0: i32, %arg1: i32, %arg2: memref<1x4x8x32xf32, #tpu.memory_space<vmem>>, %arg3: memref<1x4x8x1xf32, #tpu.memory_space<vmem>>, %arg4: memref<32x64xf32, #tpu.memory_space<vmem>>, %arg5: memref<1x64xf32, #tpu.memory_space<vmem>>, %arg6: memref<64x1xf32, #tpu.memory_space<vmem>>, %arg7: memref<1x8x32xf32, #tpu.memory_space<vmem>>) attributes {dimension_semantics = [#tpu.dimension_semantics<parallel>, #tpu.dimension_semantics<parallel>], iteration_bounds = array<i64: 2, 1>, scalar_prefetch = 0 : i64, scratch_operands = 0 : i64, tpu.core_type = #tpu.core_type<tc>, window_params = [{transform_indices = @transform_0, window_bounds = array<i64: 1, 4, 8, 32>}, {transform_indices = @transform_1, window_bounds = array<i64: 1, 4, 8, 1>}, {pipeline_mode = #tpu.pipeline_mode<synchronous>, transform_indices = @transform_2, window_bounds = array<i64: 32, 64>}, {pipeline_mode = #tpu.pipeline_mode<synchronous>, transform_indices = @transform_3, window_bounds = array<i64: 1, 64>}, {pipeline_mode = #tpu.pipeline_mode<synchronous>, transform_indices = @transform_4, window_bounds = array<i64: 64, 1>}, {transform_indices = @transform_5, window_bounds = array<i64: 1, 8, 32>}]} {
    %c0 = arith.constant 0 : index
    %c0_0 = arith.constant 0 : index
    %c0_1 = arith.constant 0 : index
    %c0_2 = arith.constant 0 : index
    %0 = vector.load %arg2[%c0, %c0_0, %c0_1, %c0_2] : memref<1x4x8x32xf32, #tpu.memory_space<vmem>>, vector<1x4x8x32xf32>
    %1 = vector.shape_cast %0 : vector<1x4x8x32xf32> to vector<4x8x32xf32>
    %c0_3 = arith.constant 0 : index
    %c0_4 = arith.constant 0 : index
    %c0_5 = arith.constant 0 : index
    %c0_6 = arith.constant 0 : index
    %2 = vector.load %arg3[%c0_3, %c0_4, %c0_5, %c0_6] : memref<1x4x8x1xf32, #tpu.memory_space<vmem>>, vector<1x4x8x1xf32>
    %3 = vector.shape_cast %2 : vector<1x4x8x1xf32> to vector<4x8x1xf32>
    %4 = vector.shape_cast %1 : vector<4x8x32xf32> to vector<32x32xf32>
    %c0_7 = arith.constant 0 : index
    %c0_8 = arith.constant 0 : index
    %5 = vector.load %arg4[%c0_7, %c0_8] : memref<32x64xf32, #tpu.memory_space<vmem>>, vector<32x64xf32>
    %cst = arith.constant dense<0.000000e+00> : vector<32x64xf32>
    %6 = tpu.matmul %4, %5, %cst {dimension_numbers = #tpu.dot_dimension_numbers<[1], [0], [0], [1], [0, 0, 1, 1], [], []>} : vector<32x32xf32>, vector<32x64xf32>, vector<32x64xf32> -> vector<32x64xf32>
    %c0_9 = arith.constant 0 : index
    %c0_10 = arith.constant 0 : index
    %7 = vector.load %arg5[%c0_9, %c0_10] : memref<1x64xf32, #tpu.memory_space<vmem>>, vector<1x64xf32>
    %8 = vector.broadcast %7 : vector<1x64xf32> to vector<32x64xf32>
    %9 = arith.addf %6, %8 : vector<32x64xf32>
    %10 = math.tanh %9 : vector<32x64xf32>
    %c0_11 = arith.constant 0 : index
    %c0_12 = arith.constant 0 : index
    %11 = vector.load %arg6[%c0_11, %c0_12] : memref<64x1xf32, #tpu.memory_space<vmem>>, vector<64x1xf32>
    %cst_13 = arith.constant dense<0.000000e+00> : vector<32x1xf32>
    %12 = tpu.matmul %10, %11, %cst_13 {dimension_numbers = #tpu.dot_dimension_numbers<[1], [0], [0], [1], [0, 0, 1, 1], [], []>} : vector<32x64xf32>, vector<64x1xf32>, vector<32x1xf32> -> vector<32x1xf32>
    %13 = vector.shape_cast %12 : vector<32x1xf32> to vector<4x8x1xf32>
    %14 = arith.mulf %3, %13 : vector<4x8x1xf32>
    %cst_14 = arith.constant 1.000000e+00 : f32
    %15 = vector.broadcast %cst_14 : f32 to vector<4x8x1xf32>
    %16 = arith.subf %15, %3 : vector<4x8x1xf32>
    %cst_15 = arith.constant -1.000000e+30 : f32
    %17 = vector.broadcast %cst_15 : f32 to vector<4x8x1xf32>
    %18 = arith.mulf %16, %17 : vector<4x8x1xf32>
    %19 = arith.addf %14, %18 : vector<4x8x1xf32>
    %cst_16 = arith.constant dense<0xFF800000> : vector<8x1xf32>
    %20 = vector.multi_reduction <maximumf>, %19, %cst_16 [0] : vector<4x8x1xf32> to vector<8x1xf32>
    %21 = vector.shape_cast %20 : vector<8x1xf32> to vector<1x8x1xf32>
    %22 = vector.broadcast %21 : vector<1x8x1xf32> to vector<4x8x1xf32>
    %23 = arith.subf %19, %22 : vector<4x8x1xf32>
    %24 = math.exp %23 : vector<4x8x1xf32>
    %cst_17 = arith.constant dense<0.000000e+00> : vector<8x1xf32>
    %25 = vector.multi_reduction <add>, %24, %cst_17 [0] : vector<4x8x1xf32> to vector<8x1xf32>
    %26 = vector.shape_cast %25 : vector<8x1xf32> to vector<1x8x1xf32>
    %27 = vector.broadcast %26 : vector<1x8x1xf32> to vector<4x8x1xf32>
    %28 = arith.divf %24, %27 : vector<4x8x1xf32>
    %29 = vector.broadcast %28 : vector<4x8x1xf32> to vector<4x8x32xf32>
    %30 = arith.mulf %29, %1 : vector<4x8x32xf32>
    %cst_18 = arith.constant dense<0.000000e+00> : vector<8x32xf32>
    %31 = vector.multi_reduction <add>, %30, %cst_18 [0] : vector<4x8x32xf32> to vector<8x32xf32>
    %cst_19 = arith.constant dense<0.000000e+00> : vector<8x1xf32>
    %32 = vector.multi_reduction <add>, %3, %cst_19 [0] : vector<4x8x1xf32> to vector<8x1xf32>
    %cst_20 = arith.constant 1.000000e+00 : f32
    %33 = vector.broadcast %cst_20 : f32 to vector<8x1xf32>
    %34 = arith.minimumf %32, %33 : vector<8x1xf32>
    %35 = vector.broadcast %34 : vector<8x1xf32> to vector<8x32xf32>
    %36 = arith.mulf %31, %35 : vector<8x32xf32>
    %c0_21 = arith.constant 0 : index
    %c0_22 = arith.constant 0 : index
    %c0_23 = arith.constant 0 : index
    %37 = vector.load %arg7[%c0_21, %c0_22, %c0_23] : memref<1x8x32xf32, #tpu.memory_space<vmem>>, vector<1x8x32xf32>
    %38 = vector.shape_cast %37 : vector<1x8x32xf32> to vector<8x32xf32>
    %39 = vector.shape_cast %36 : vector<8x32xf32> to vector<1x8x32xf32>
    tpu.vector_store %arg7[%c0_21, %c0_22, %c0_23], %39 {strides = array<i32>} : memref<1x8x32xf32, #tpu.memory_space<vmem>>, vector<1x8x32xf32>,
    return
  }
  func.func @transform_0(%arg0: i32, %arg1: i32) -> (i32, i32, i32, i32) {
    %c0_i32 = arith.constant 0 : i32
    %c0_i32_0 = arith.constant 0 : i32
    %c0_i32_1 = arith.constant 0 : i32
    return %arg0, %c0_i32, %arg1, %c0_i32_0 : i32, i32, i32, i32
  }
  func.func @transform_1(%arg0: i32, %arg1: i32) -> (i32, i32, i32, i32) {
    %c0_i32 = arith.constant 0 : i32
    %c0_i32_0 = arith.constant 0 : i32
    %c0_i32_1 = arith.constant 0 : i32
    return %arg0, %c0_i32, %arg1, %c0_i32_0 : i32, i32, i32, i32
  }
  func.func @transform_2(%arg0: i32, %arg1: i32) -> (i32, i32) {
    %c0_i32 = arith.constant 0 : i32
    %c0_i32_0 = arith.constant 0 : i32
    %c0_i32_1 = arith.constant 0 : i32
    return %c0_i32, %c0_i32_0 : i32, i32
  }
  func.func @transform_3(%arg0: i32, %arg1: i32) -> (i32, i32) {
    %c0_i32 = arith.constant 0 : i32
    %c0_i32_0 = arith.constant 0 : i32
    %c0_i32_1 = arith.constant 0 : i32
    return %c0_i32, %c0_i32_0 : i32, i32
  }
  func.func @transform_4(%arg0: i32, %arg1: i32) -> (i32, i32) {
    %c0_i32 = arith.constant 0 : i32
    %c0_i32_0 = arith.constant 0 : i32
    %c0_i32_1 = arith.constant 0 : i32
    return %c0_i32, %c0_i32_0 : i32, i32
  }
  func.func @transform_5(%arg0: i32, %arg1: i32) -> (i32, i32, i32) {
    %c0_i32 = arith.constant 0 : i32
    %c0_i32_0 = arith.constant 0 : i32
    return %arg0, %arg1, %c0_i32 : i32, i32, i32
  }
}

</mosaic_0001>

<llo_original>
// kernel: tpu_custom_call.1
$region0: #{tpu_custom_call.1}
  #allocation0 [shape = 'u32[]', space=smem, size = 0x4, offset = 0x4, fixed_abs, tag = 'smem constant byte address 0x4 - core index']
  #allocation1 [shape = 'u32[72,128]{1,0:T(1,128)}', space=vmem, size = 0x9000, scoped, tag = 'internal scratch']
  %s0 = inlined_call_operand.vmem [shape: f32[2,4,8,32], index: 0, kind: input, shape index: {}]
  %s1 = inlined_call_operand.vmem [shape: f32[2,4,8,1], index: 1, kind: input, shape index: {}]
  %s2 = inlined_call_operand.vmem [shape: f32[32,64], index: 2, kind: input, shape index: {}]
  %s3 = inlined_call_operand.vmem [shape: f32[1,64], index: 3, kind: input, shape index: {}]
  %s4 = inlined_call_operand.vmem [shape: f32[64,1], index: 4, kind: input, shape index: {}]
  %s5 = inlined_call_operand.hbm [shape: f32[2,8,32], index: 5, kind: output, shape index: {}]
  %s6 = sld [smem:[#allocation0]]
  $region53: #{tpu_custom_call.1} parent=0
    _
  %s8 = ssub.s32 1, %s6
  %s9 = scalar_select 0, %s8, %s6
  $region1: #{tpu_custom_call.1} parent=0
    #allocation2 [shape = 'u8[8192]{0}', space=vmem, size = 0x2000, scoped, tag = 'output window, operand 0']
    #allocation3 [shape = 's32[2]{0}', space=sflag, size = 0x8, scoped, tag = 'scoped memory for tpu_custom_call.1']
    %10 = vsyncpa [#allocation3], 0
    %s11 = scalar_lea.sflag [#allocation3], 1
    %12 = vsyncpa %s11, 0
    loop: start=0, step=1, limit=4
    $region2: #{tpu_custom_call.1} parent=1 // loop_pre_header
      _
    $region3: #{tpu_custom_call.1} parent=1 // loop_header
      %s14 = sphi 0, %s18
      %p15 = scmp.ge.s32.totalorder %s14, 4
      %s21 = sphi 0, %s33
      %s22 = sphi 0, %s29
      %s23 = sphi 0, %s21
      %s24 = sphi 0, %s22
      %s25 = sphi 0, %s23
      %s26 = sphi 0, %s24
      %s38 = sphi 0, %s40
      %s41 = sphi 0, %s38
      %s42 = sphi 0, %s41
      %s58 = sphi 0, %s42
      %s66 = sphi 0, %s68
      %s69 = sphi 0, %s66
      %s70 = sphi 0, %s69
      %s86 = sphi 0, %s70
      %s90 = sphi 0, %s90
      %s92 = sphi 0, %s90
      %s93 = sphi 0, %s92
      %s107 = sphi 0, %s93
      %s111 = sphi 0, %s111
      %s113 = sphi 0, %s111
      %s114 = sphi 0, %s113
      %s128 = sphi 0, %s114
      %s132 = sphi 0, %s132
      %s134 = sphi 0, %s132
      %s135 = sphi 0, %s134
      %s149 = sphi 0, %s135
      %s157 = sphi 0, %s159
      %s160 = sphi 0, %s157
      %s161 = sphi 0, %s160
      %s177 = sphi 0, %s161
    $region4: #{tpu_custom_call.1} parent=1 // loop_header_branch
      %17 = sbr.rel (%p15) target = $region8
    $region5: #{tpu_custom_call.1} parent=1 // loop_body
      %s19 = ssub.s32 %s14, 1
      %s20 = ssub.s32 %s14, 2
      %s27 = sadd.s32 1, %s22
      %p28 = scmp.ge.s32.totalorder %s27, 1
      %s29 = scalar_select %p28, 0, %s27
      %s30 = sadd.s32 1, %s21
      %s31 = scalar_select %p28, %s30, %s21
      %p32 = scmp.ge.s32.totalorder %s31, 2
      %s33 = scalar_select %p32, 0, %s31
      %s34 = ssub.s32 %s21, %s33
      %s35 = ssub.s32 %s22, %s29
      %s36 = sor.u32 %s34, %s35
      %p37 = scmp.eq.s32.totalorder %s36, 0
      %s39 = sadd.s32 %s38, 1
      %s40 = scalar_select %p37, %s38, %s39
      %p43 = pneg %p37
      %p44 = scmp.eq.s32.totalorder %s14, 1
      %p45 = por %p43, %p44
      %p46 = scmp.ne.s32.totalorder %s38, %s41
      %p47 = scmp.eq.s32.totalorder %s14, 0
      %p48 = por %p46, %p47
      %p49 = scmp.ne.s32.totalorder %s38, %s41
      %p50 = scmp.eq.s32.totalorder %s19, 1
      %p51 = por %p49, %p50
      %p52 = scmp.ne.s32.totalorder %s41, %s42
      %p53 = scmp.eq.s32.totalorder %s19, 0
      %p54 = por %p52, %p53
      %p55 = scmp.ne.s32.totalorder %s41, %s42
      %p56 = scmp.eq.s32.totalorder %s20, 1
      %p57 = por %p55, %p56
      %p59 = scmp.ne.s32.totalorder %s42, %s58
      %p60 = scmp.eq.s32.totalorder %s20, 0
      %p61 = por %p59, %p60
      %s62 = ssub.s32 %s21, %s33
      %s63 = ssub.s32 %s22, %s29
      %s64 = sor.u32 %s62, %s63
      %p65 = scmp.eq.s32.totalorder %s64, 0
      %s67 = sadd.s32 %s66, 1
      %s68 = scalar_select %p65, %s66, %s67
      %p71 = pneg %p65
      %p72 = scmp.eq.s32.totalorder %s14, 1
      %p73 = por %p71, %p72
      %p74 = scmp.ne.s32.totalorder %s66, %s69
      %p75 = scmp.eq.s32.totalorder %s14, 0
      %p76 = por %p74, %p75
      %p77 = scmp.ne.s32.totalorder %s66, %s69
      %p78 = scmp.eq.s32.totalorder %s19, 1
      %p79 = por %p77, %p78
      %p80 = scmp.ne.s32.totalorder %s69, %s70
      %p81 = scmp.eq.s32.totalorder %s19, 0
      %p82 = por %p80, %p81
      %p83 = scmp.ne.s32.totalorder %s69, %s70
      %p84 = scmp.eq.s32.totalorder %s20, 1
      %p85 = por %p83, %p84
      %p87 = scmp.ne.s32.totalorder %s70, %s86
      %p88 = scmp.eq.s32.totalorder %s20, 0
      %p89 = por %p87, %p88
      %s91 = sadd.s32 %s90, 1
      %p94 = scmp.eq.s32.totalorder %s14, 1
      %p95 = scmp.ne.s32.totalorder %s90, %s92
      %p96 = scmp.eq.s32.totalorder %s14, 0
      %p97 = por %p95, %p96
      %p98 = scmp.ne.s32.totalorder %s90, %s92
      %p99 = scmp.eq.s32.totalorder %s19, 1
      %p100 = por %p98, %p99
      %p101 = scmp.ne.s32.totalorder %s92, %s93
      %p102 = scmp.eq.s32.totalorder %s19, 0
      %p103 = por %p101, %p102
      %p104 = scmp.ne.s32.totalorder %s92, %s93
      %p105 = scmp.eq.s32.totalorder %s20, 1
      %p106 = por %p104, %p105
      %p108 = scmp.ne.s32.totalorder %s93, %s107
      %p109 = scmp.eq.s32.totalorder %s20, 0
      %p110 = por %p108, %p109
      %s112 = sadd.s32 %s111, 1
      %p115 = scmp.eq.s32.totalorder %s14, 1
      %p116 = scmp.ne.s32.totalorder %s111, %s113
      %p117 = scmp.eq.s32.totalorder %s14, 0
      %p118 = por %p116, %p117
      %p119 = scmp.ne.s32.totalorder %s111, %s113
      %p120 = scmp.eq.s32.totalorder %s19, 1
      %p121 = por %p119, %p120
      %p122 = scmp.ne.s32.totalorder %s113, %s114
      %p123 = scmp.eq.s32.totalorder %s19, 0
      %p124 = por %p122, %p123
      %p125 = scmp.ne.s32.totalorder %s113, %s114
      %p126 = scmp.eq.s32.totalorder %s20, 1
      %p127 = por %p125, %p126
      %p129 = scmp.ne.s32.totalorder %s114, %s128
      %p130 = scmp.eq.s32.totalorder %s20, 0
      %p131 = por %p129, %p130
      %s133 = sadd.s32 %s132, 1
      %p136 = scmp.eq.s32.totalorder %s14, 1
      %p137 = scmp.ne.s32.totalorder %s132, %s134
      %p138 = scmp.eq.s32.totalorder %s14, 0
      %p139 = por %p137, %p138
      %p140 = scmp.ne.s32.totalorder %s132, %s134
      %p141 = scmp.eq.s32.totalorder %s19, 1
      %p142 = por %p140, %p141
      %p143 = scmp.ne.s32.totalorder %s134, %s135
      %p144 = scmp.eq.s32.totalorder %s19, 0
      %p145 = por %p143, %p144
      %p146 = scmp.ne.s32.totalorder %s134, %s135
      %p147 = scmp.eq.s32.totalorder %s20, 1
      %p148 = por %p146, %p147
      %p150 = scmp.ne.s32.totalorder %s135, %s149
      %p151 = scmp.eq.s32.totalorder %s20, 0
      %p152 = por %p150, %p151
      %s153 = ssub.s32 %s21, %s33
      %s154 = ssub.s32 %s22, %s29
      %s155 = sor.u32 %s153, %s154
      %p156 = scmp.eq.s32.totalorder %s155, 0
      %s158 = sadd.s32 %s157, 1
      %s159 = scalar_select %p156, %s157, %s158
      %p162 = pneg %p156
      %p163 = scmp.eq.s32.totalorder %s14, 1
      %p164 = por %p162, %p163
      %p165 = scmp.ne.s32.totalorder %s157, %s160
      %p166 = scmp.eq.s32.totalorder %s14, 0
      %p167 = por %p165, %p166
      %p168 = scmp.ne.s32.totalorder %s157, %s160
      %p169 = scmp.eq.s32.totalorder %s19, 1
      %p170 = por %p168, %p169
      %p171 = scmp.ne.s32.totalorder %s160, %s161
      %p172 = scmp.eq.s32.totalorder %s19, 0
      %p173 = por %p171, %p172
      %p174 = scmp.ne.s32.totalorder %s160, %s161
      %p175 = scmp.eq.s32.totalorder %s20, 1
      %p176 = por %p174, %p175
      %p178 = scmp.ne.s32.totalorder %s161, %s177
      %p179 = scmp.eq.s32.totalorder %s20, 0
      %p180 = por %p178, %p179
      %p181 = scmp.le.s32.totalorder 1, %s14
      %p182 = scmp.lt.s32.totalorder %s14, 3
      %p183 = pnand %p181, %p182
      %p184 = pneg %p183
      // Predicated region
      $region9: #{tpu_custom_call.1} parent=5 // pred_check
        _
      $region10: #{tpu_custom_call.1} parent=5 // pred_check_branch
        %186 = sbr.rel (%p183) target = $region12
      $region11: #{tpu_custom_call.1} parent=5 // pred_region
        %s187 = ssub.s32 %s14, 1
        // Predicated region
        $region13: #{tpu_custom_call.1} parent=11 // pred_check
          %p188 = pneg %p103
        $region14: #{tpu_custom_call.1} parent=11 // pred_check_branch
          %190 = sbr.rel (%p188) target = $region16
        $region15: #{tpu_custom_call.1} parent=11 // pred_region
          _
        $region16: #{tpu_custom_call.1} parent=11 // pred_fallthru
          _
        // Predicated region
        $region17: #{tpu_custom_call.1} parent=11 // pred_check
          %p191 = pneg %p124
        $region18: #{tpu_custom_call.1} parent=11 // pred_check_branch
          %193 = sbr.rel (%p191) target = $region20
        $region19: #{tpu_custom_call.1} parent=11 // pred_region
          _
        $region20: #{tpu_custom_call.1} parent=11 // pred_fallthru
          _
        // Predicated region
        $region21: #{tpu_custom_call.1} parent=11 // pred_check
          %p194 = pneg %p145
        $region22: #{tpu_custom_call.1} parent=11 // pred_check_branch
          %196 = sbr.rel (%p194) target = $region24
        $region23: #{tpu_custom_call.1} parent=11 // pred_region
          _
        $region24: #{tpu_custom_call.1} parent=11 // pred_fallthru
          _
      $region12: #{tpu_custom_call.1} parent=5 // pred_fallthru
        _
      %p197 = scmp.lt.s32.totalorder %s14, 2
      // Predicated region
      $region25: #{tpu_custom_call.1} parent=5 // pred_check
        %p198 = pneg %p197
      $region26: #{tpu_custom_call.1} parent=5 // pred_check_branch
        %200 = sbr.rel (%p198) target = $region28
      $region27: #{tpu_custom_call.1} parent=5 // pred_region
        // Predicated region
        $region29: #{tpu_custom_call.1} parent=27 // pred_check
          %p201 = pneg %p48
        $region30: #{tpu_custom_call.1} parent=27 // pred_check_branch
          %203 = sbr.rel (%p201) target = $region32
        $region31: #{tpu_custom_call.1} parent=27 // pred_region
          %p204 = scmp.lt.s32.totalorder %s21, 1
          %s205 = scalar_select %p204, %s21, 1
          %p206 = scmp.lt.s32.totalorder %s22, 0
          %s207 = scalar_select %p206, %s22, 0
          %s208 = smul.addr %s205, 4
          %s209 = sadd.s32 %s207, %s208
          %s210 = smul.addr %s209, 8
          %s211 = scalar_lea.vmem %s0, %s210
        $region32: #{tpu_custom_call.1} parent=27 // pred_fallthru
          _
        // Predicated region
        $region33: #{tpu_custom_call.1} parent=27 // pred_check
          %p212 = pneg %p76
        $region34: #{tpu_custom_call.1} parent=27 // pred_check_branch
          %214 = sbr.rel (%p212) target = $region36
        $region35: #{tpu_custom_call.1} parent=27 // pred_region
          %p215 = scmp.lt.s32.totalorder %s21, 1
          %s216 = scalar_select %p215, %s21, 1
          %p217 = scmp.lt.s32.totalorder %s22, 0
          %s218 = scalar_select %p217, %s22, 0
          %s219 = smul.addr %s216, 4
          %s220 = sadd.s32 %s218, %s219
          %s221 = smul.addr %s220, 8
          %s222 = scalar_lea.vmem %s1, %s221
        $region36: #{tpu_custom_call.1} parent=27 // pred_fallthru
          _
      $region28: #{tpu_custom_call.1} parent=5 // pred_fallthru
        _
      %p223 = scmp.le.s32.totalorder 1, %s14
      %p224 = scmp.lt.s32.totalorder %s14, 3
      %p225 = pnand %p223, %p224
      %p226 = pneg %p225
      // Predicated region
      $region37: #{tpu_custom_call.1} parent=5 // pred_check
        _
      $region38: #{tpu_custom_call.1} parent=5 // pred_check_branch
        %228 = sbr.rel (%p225) target = $region40
      $region39: #{tpu_custom_call.1} parent=5 // pred_region
        %s229 = ssub.s32 %s14, 1
        %p230 = scmp.lt.s32.totalorder %s23, 1
        %s231 = scalar_select %p230, %s23, 1
        %p232 = scmp.lt.s32.totalorder %s24, 0
        %s233 = scalar_select %p232, %s24, 0
        %s234 = smul.addr %s231, 4
        %s235 = sadd.s32 %s233, %s234
        %s236 = smul.addr %s235, 8
        %s237 = scalar_lea.vmem %s0, %s236
        %p238 = pneg %p54
        %p239 = pneg %p51
        %p240 = scmp.lt.s32.totalorder %s23, 1
        %s241 = scalar_select %p240, %s23, 1
        %p242 = scmp.lt.s32.totalorder %s24, 0
        %s243 = scalar_select %p242, %s24, 0
        %s244 = smul.addr %s241, 4
        %s245 = sadd.s32 %s243, %s244
        %s246 = smul.addr %s245, 8
        %s247 = scalar_lea.vmem %s1, %s246
        %p248 = pneg %p82
        %p249 = pneg %p79
        %p250 = pneg %p103
        %p251 = pneg %p100
        %p252 = pneg %p124
        %p253 = pneg %p121
        %p254 = pneg %p145
        %p255 = pneg %p142
        %p256 = pneg %p173
        %p257 = pneg %p170
        %s258 = sand.u32 %s160, 1
        %s259 = scalar_lea.sflag [#allocation3], %s258
        %s260 = sand.u32 %s160, 1
        %s261 = smul.addr %s260, 8
        %s262 = scalar_lea.vmem [#allocation2], %s261
        %p263 = scmp.lt.s32.totalorder %s23, 1
        %s264 = scalar_select %p263, %s23, 1
        %p265 = scmp.lt.s32.totalorder %s24, 0
        %s266 = scalar_select %p265, %s24, 0
        %s267 = smul.addr %s264, 4
        %s268 = sadd.s32 %s266, %s267
        %s269 = smul.addr %s268, 8
        %s270 = scalar_lea.vmem %s0, %s269
        %p271 = scmp.lt.s32.totalorder %s23, 1
        %s272 = scalar_select %p271, %s23, 1
        %p273 = scmp.lt.s32.totalorder %s24, 0
        %s274 = scalar_select %p273, %s24, 0
        %s275 = smul.addr %s272, 4
        %s276 = sadd.s32 %s274, %s275
        %s277 = smul.addr %s276, 8
        %s278 = scalar_lea.vmem %s1, %s277
        %v279 = vld [vmem:[%s270] sm:$0xff]
        %v280 = vld [vmem:[%s270 + $0x8] sm:$0xff]
        %v281 = vld [vmem:[%s270 + $0x10] sm:$0xff]
        %v282 = vld [vmem:[%s270 + $0x18] sm:$0xff]
        %v283 = vld [vmem:[%s278] sm:$0xff]
        %v284 = vld [vmem:[%s278 + $0x8] sm:$0xff]
        %v285 = vld [vmem:[%s278 + $0x10] sm:$0xff]
        %v286 = vld [vmem:[%s278 + $0x18] sm:$0xff]
        %v287 = vld [vmem:[%s2] sm:$0xff]
        %v288 = vld [vmem:[%s2 + $0x8] sm:$0xff]
        %v289 = vld [vmem:[%s2 + $0x10] sm:$0xff]
        %v290 = vld [vmem:[%s2 + $0x18] sm:$0xff]
        %v291 = vld [vmem:[%s3] sm:$0x1]
        %v293 = vperm.slane %v291, 0
        %vm295 = vcmask 261120
        %v297 = vsel %vm295, %v279, 0
        %v300 = vsel %vm295, %v280, 0
        %v303 = vsel %vm295, %v281, 0
        %v306 = vsel %vm295, %v282, 0
        %308 = vmatpush.msra.mxu0 0.0
        %309 = vmatpush.msra.mxu0 0.0
        %310 = vmatpush.msra.mxu0 0.0
        %311 = vmatpush.msra.mxu0 0.0
        %312 = vmatpush.msra.mxu0 0.0
        %313 = vmatpush.msra.mxu0 0.0
        %314 = vmatpush.msra.mxu0 0.0
        %315 = vmatpush.msra.mxu0 0.0
        %316 = vmatpush.msra.mxu0 0.0
        %317 = vmatpush.msra.mxu0 0.0
        %318 = vmatpush.msra.mxu0 0.0
        %319 = vmatpush.msra.mxu0 0.0
        %320 = vmatpush.msra.mxu0 %v290
        %321 = vmatpush.msra.mxu0 %v289
        %322 = vmatpush.msra.mxu0 %v288
        %323 = vmatpush.msra.mxu0 %v287
        %324 = vmatmul.f32.gmra.mxu0 %v297
        %v325 = vpop.f32.mrf.mxu0
        %v326 = vadd.f32 %v293, %v325
        %327 = vmatmul.f32.gmra.mxu0 %v300
        %v328 = vpop.f32.mrf.mxu0
        %v329 = vadd.f32 %v293, %v328
        %330 = vmatmul.f32.gmra.mxu0 %v303
        %v331 = vpop.f32.mrf.mxu0
        %v332 = vadd.f32 %v293, %v331
        %333 = vmatmul.f32.gmra.mxu0 %v306
        %v334 = vpop.f32.mrf.mxu0
        %v335 = vadd.f32 %v293, %v334
        %336 = vdwg.mxu0
        %v337 = vtanh.pop %v326
        %v338 = vtanh.pop %v329
        %v339 = vtanh.pop %v332
        %v340 = vtanh.pop %v335
        %v341 = vld [vmem:[%s4] sm:$0xff]
        %v342 = vld [vmem:[%s4 + $0x8] sm:$0xff]
        %v343 = vld [vmem:[%s4 + $0x10] sm:$0xff]
        %v344 = vld [vmem:[%s4 + $0x18] sm:$0xff]
        %v345 = vld [vmem:[%s4 + $0x20] sm:$0xff]
        %v346 = vld [vmem:[%s4 + $0x28] sm:$0xff]
        %v347 = vld [vmem:[%s4 + $0x30] sm:$0xff]
        %v348 = vld [vmem:[%s4 + $0x38] sm:$0xff]
        %vm349 = vcmask 523264
        %v351 = vsel %vm349, %v337, 0
        %v354 = vsel %vm349, %v338, 0
        %v357 = vsel %vm349, %v339, 0
        %v360 = vsel %vm349, %v340, 0
        %362 = vmatpush.msra.mxu0 0.0
        %363 = vmatpush.msra.mxu0 0.0
        %364 = vmatpush.msra.mxu0 0.0
        %365 = vmatpush.msra.mxu0 0.0
        %366 = vmatpush.msra.mxu0 0.0
        %367 = vmatpush.msra.mxu0 0.0
        %368 = vmatpush.msra.mxu0 0.0
        %369 = vmatpush.msra.mxu0 0.0
        %370 = vmatpush.msra.mxu0 %v348
        %371 = vmatpush.msra.mxu0 %v347
        %372 = vmatpush.msra.mxu0 %v346
        %373 = vmatpush.msra.mxu0 %v345
        %374 = vmatpush.msra.mxu0 %v344
        %375 = vmatpush.msra.mxu0 %v343
        %376 = vmatpush.msra.mxu0 %v342
        %377 = vmatpush.msra.mxu0 %v341
        %378 = vmatmul.f32.gmra.mxu0 %v351
        %v379 = vpop.f32.mrf.mxu0
        %v380 = vadd.f32 0.0, %v379
        %381 = vmatmul.f32.gmra.mxu0 %v354
        %v382 = vpop.f32.mrf.mxu0
        %v383 = vadd.f32 0.0, %v382
        %384 = vmatmul.f32.gmra.mxu0 %v357
        %v385 = vpop.f32.mrf.mxu0
        %v386 = vadd.f32 0.0, %v385
        %387 = vmatmul.f32.gmra.mxu0 %v360
        %v388 = vpop.f32.mrf.mxu0
        %v389 = vadd.f32 0.0, %v388
        %390 = vdwg.mxu0
        %v391 = vmul.f32 %v283, %v380
        %v392 = vmul.f32 %v284, %v383
        %v393 = vmul.f32 %v285, %v386
        %v394 = vmul.f32 %v286, %v389
        %v395 = vsub.f32 1.0, %v283
        %v396 = vsub.f32 1.0, %v284
        %v397 = vsub.f32 1.0, %v285
        %v398 = vsub.f32 1.0, %v286
        %v399 = vmul.f32 %v395, -1e+30
        %v400 = vmul.f32 %v396, -1e+30
        %v401 = vmul.f32 %v397, -1e+30
        %v402 = vmul.f32 %v398, -1e+30
        %v403 = vadd.f32 %v391, %v399
        %v404 = vadd.f32 %v392, %v400
        %v405 = vadd.f32 %v393, %v401
        %v406 = vadd.f32 %v394, %v402
        %vm407 = vcmask 7168
        %v408 = vsel %vm407, %v403, -inf
        %v409 = vsel %vm407, %v404, -inf
        %v410 = vsel %vm407, %v405, -inf
        %v411 = vsel %vm407, %v406, -inf
        %v412 = vmax.f32 %v408, %v409
        %v413 = vmax.f32 %v410, %v411
        %v414 = vmax.f32 %v412, %v413
        %v415 = vsub.f32 %v403, %v414
        %v416 = vsub.f32 %v404, %v414
        %v417 = vsub.f32 %v405, %v414
        %v418 = vsub.f32 %v406, %v414
        %v419 = vmul.f32 %v415, 1.442695
        %v420 = vpow.pop %v419
        %v421 = vmul.f32 %v416, 1.442695
        %v422 = vpow.pop %v421
        %v423 = vmul.f32 %v417, 1.442695
        %v424 = vpow.pop %v423
        %v425 = vmul.f32 %v418, 1.442695
        %v426 = vpow.pop %v425
        %v427 = vsel %vm407, %v420, 0.0
        %v428 = vsel %vm407, %v422, 0.0
        %v429 = vadd.f32 %v427, %v428
        %v430 = vsel %vm407, %v424, 0.0
        %v431 = vadd.f32 %v429, %v430
        %v432 = vsel %vm407, %v426, 0.0
        %v433 = vadd.f32 %v431, %v432
        %v434 = vrcp.pop %v433
        %v435 = vmul.f32 %v433, %v434
        %v436 = vsub.f32 1.0, %v435
        %v437 = vmul.f32 %v434, %v436
        %v438 = vadd.f32 %v434, %v437
        %vm439 = vweird.f32 %v433
        %vm440 = vweird.f32 %v434
        %vm441 = vmor %vm439, %vm440
        %v442 = vsel %vm441, %v434, %v438
        %v443 = vand.u32 2147483647, %v433
        %vm444 = vcmp.eq.f32.partialorder %v443, 8.507059e+37
        %v445 = vand.u32 %v433, 2147483648
        %v446 = vor.u32 1.1754944e-38, %v445
        %v447 = vsel %vm444, %v446, %v442
        %v448 = vmul.f32 %v420, %v447
        %v449 = vmul.f32 %v422, %v447
        %v450 = vmul.f32 %v424, %v447
        %v451 = vmul.f32 %v426, %v447
        %453 = vset.pattern.permute.xlu0 0
        %454 = vperm.xlu0 %453, %v448
        %v455 = vpop.permute.xlu0 %454
        %458 = vset.pattern.permute.xlu0 0
        %459 = vperm.xlu0 %458, %v449
        %v460 = vpop.permute.xlu0 %459
        %463 = vset.pattern.permute.xlu0 0
        %464 = vperm.xlu0 %463, %v450
        %v465 = vpop.permute.xlu0 %464
        %468 = vset.pattern.permute.xlu0 0
        %469 = vperm.xlu0 %468, %v451
        %v470 = vpop.permute.xlu0 %469
        %v472 = vmul.f32 %v455, %v279
        %v473 = vmul.f32 %v460, %v280
        %v474 = vmul.f32 %v465, %v281
        %v475 = vmul.f32 %v470, %v282
        %v476 = vsel %vm295, %v472, 0.0
        %v477 = vsel %vm295, %v473, 0.0
        %v478 = vadd.f32 %v476, %v477
        %v479 = vsel %vm295, %v474, 0.0
        %v480 = vadd.f32 %v478, %v479
        %v481 = vsel %vm295, %v475, 0.0
        %v482 = vadd.f32 %v480, %v481
        %v483 = vsel %vm407, %v283, 0.0
        %v484 = vsel %vm407, %v284, 0.0
        %v485 = vadd.f32 %v483, %v484
        %v486 = vsel %vm407, %v285, 0.0
        %v487 = vadd.f32 %v485, %v486
        %v488 = vsel %vm407, %v286, 0.0
        %v489 = vadd.f32 %v487, %v488
        %v490 = vmin.f32 %v489, 1.0
        %492 = vset.pattern.permute.xlu0 0
        %493 = vperm.xlu0 %492, %v490
        %v494 = vpop.permute.xlu0 %493
        %v496 = vmul.f32 %v482, %v494
        %497 = vst.msk [vmem:[%s262] sm:$0xff] %vm295, %v496
        %s498 = sand.u32 %s160, 1
        %s499 = scalar_lea.sflag [#allocation3], %s498
        %s500 = sand.u32 %s160, 1
        %s501 = smul.addr %s500, 8
        %s502 = scalar_lea.vmem [#allocation2], %s501
        // Predicated region
        $region41: #{tpu_custom_call.1} parent=39 // pred_check
          %p503 = pneg %p170
        $region42: #{tpu_custom_call.1} parent=39 // pred_check_branch
          %505 = sbr.rel (%p503) target = $region44
        $region43: #{tpu_custom_call.1} parent=39 // pred_region
          %507 = vsyncadd %s499, 0
          %s508 = sadd.s32 %s24, %s23
          %s509 = smul.addr %s508, 8
          %s510 = scalar_lea.hbm %s5, %s509
          %s512 = sshll.u32 %s502, 4
          %s513 = int_to_ptr.vmem [resolvable:$true] %s512
          %s514 = sshll.u32 %s510, 4
          %s515 = int_to_ptr.hbm [resolvable:$true] %s514
          %517 = dma.vmem_to_hbm [thread:$0]  %s513, 128, %s515, %s499
        $region44: #{tpu_custom_call.1} parent=39 // pred_fallthru
          _
      $region40: #{tpu_custom_call.1} parent=5 // pred_fallthru
        _
      %p518 = scmp.le.s32.totalorder 2, %s14
      // Predicated region
      $region45: #{tpu_custom_call.1} parent=5 // pred_check
        %p519 = pneg %p518
      $region46: #{tpu_custom_call.1} parent=5 // pred_check_branch
        %521 = sbr.rel (%p519) target = $region48
      $region47: #{tpu_custom_call.1} parent=5 // pred_region
        %s522 = ssub.s32 %s14, 2
        // Predicated region
        $region49: #{tpu_custom_call.1} parent=47 // pred_check
          %p523 = pneg %p176
        $region50: #{tpu_custom_call.1} parent=47 // pred_check_branch
          %525 = sbr.rel (%p523) target = $region52
        $region51: #{tpu_custom_call.1} parent=47 // pred_region
          %s526 = sand.u32 %s161, 1
          %s527 = scalar_lea.sflag [#allocation3], %s526
          %s528 = sand.u32 %s161, 1
          %s529 = smul.addr %s528, 8
          %s530 = scalar_lea.vmem [#allocation2], %s529
          %532 = dma.done %s527, 128
        $region52: #{tpu_custom_call.1} parent=47 // pred_fallthru
          _
      $region48: #{tpu_custom_call.1} parent=5 // pred_fallthru
        _
    $region6: #{tpu_custom_call.1} parent=1 // loop_footer
      %s18 = sadd.s32 1, %s14
    $region7: #{tpu_custom_call.1} parent=1 // loop_footer_branch
      %13 = sbr.rel target = $region3
    $region8: #{tpu_custom_call.1} parent=1 // loop_exit
      _
    %533 = vsyncpa [#allocation3], 1
    %s534 = scalar_lea.sflag [#allocation3], 1
    %535 = vsyncpa %s534, 1

</llo_original>
